<compile_context>
chip_gen: v6e
topology: v6e:2x2x1
jax: 0.10.0
libtpu: 0.0.40
codegen_flags: <defaults>
</compile_context>

<pallas_src>
import jax
import jax.numpy as jnp
from jax.experimental import pallas as pl
from jax.experimental.pallas import tpu as pltpu


def _mask_modal_kernel(mask_ref, src_i_ref, src_c_ref, x_ref, o_ref):
    # mask_ref / src_i_ref / src_c_ref: SMEM int32 scalar-prefetch tables.
    # x_ref / o_ref: VMEM tiles of shape (1, r_blk, lane).
    i = pl.program_id(0)
    keep = mask_ref[i] != 0

    @pl.when(keep)
    def _copy():
        o_ref[...] = x_ref[...]

    @pl.when(jnp.logical_not(keep))
    def _zero():
        # Masked slab: pure zero-store; x_ref is never read (and its block
        # was not re-fetched from HBM for this step).
        o_ref[...] = jnp.zeros_like(o_ref)


def _vmem_budget():
    """Generation-aware (vmem_limit_bytes, target_block_bytes)."""
    phys = 128 << 20  # v5e / v6e physical VMEM; conservative default.
    try:
        info = pltpu.get_tpu_info()
        phys = int(getattr(info, "vmem_capacity_bytes", phys))
    except Exception:
        pass
    # Scoped limit we request: half of physical, capped at 64 MiB
    # (v7x: 64 MiB physical -> 32 MiB scoped; v5e/v6e: 128 MiB -> 64 MiB).
    vmem_limit = min(max(phys // 2, 16 << 20), 64 << 20)
    # in + out blocks, each double-buffered -> 4 live blocks; keep ~20%
    # headroom.  Cap at 4 MiB: past that, per-step overhead is already <10%
    # of step time even at v7x's ~3.2 TB/s.
    target_block = min(4 << 20, vmem_limit // 5)
    return vmem_limit, target_block


def _choose_tiling(slab_elems, itemsize, target_block_bytes, lane_cap=1024):
    """View one slab of `slab_elems` elements as (rows, lane).

    Returns (rows, lane, row_block, num_chunks), or None when slab_elems is
    not a multiple of 128 (caller falls back to plain XLA select).
    """
    if slab_elems % 128 != 0:
        return None
    lane = 0
    # Prefer a lane width (multiple of 128) whose co-factor keeps full 8-row
    # sublane tiles.
    for cand in range(lane_cap, 127, -128):
        if slab_elems % cand == 0 and (slab_elems // cand) % 8 == 0:
            lane = cand
            break
    if lane == 0:
        for cand in range(lane_cap, 127, -128):
            if slab_elems % cand == 0:
                lane = cand
                break
    rows = slab_elems // lane
    row_bytes = lane * itemsize

    if rows % 8 == 0:
        # Largest multiple-of-8 divisor of rows whose block fits the budget.
        row_block = 8
        for r in range(8, rows + 1, 8):
            if rows % r == 0 and r * row_bytes <= target_block_bytes:
                row_block = r
        num_chunks = rows // row_block
    else:
        if rows * row_bytes <= target_block_bytes:
            # Whole slab as one block (block dim == full array dim is legal).
            row_block = rows
            num_chunks = 1
        else:
            # Large non-8-divisible slab: multiple-of-8 row block, cdiv grid;
            # Pallas masks the boundary block's out-of-range rows.
            row_block = max(8, (target_block_bytes // row_bytes) // 8 * 8)
            num_chunks = pl.cdiv(rows, row_block)
    return rows, lane, row_block, num_chunks


def mask_modal(x, mask, *, target_block_bytes=None):
    """x: (B, K, C, H, W, Z), mask: (B, K) bool -> (B, K*C, H, W, Z)."""
    B, K, C, H, W, Z = x.shape
    N = B * K
    S = C * H * W * Z
    itemsize = jnp.dtype(x.dtype).itemsize

    vmem_limit, default_target = _vmem_budget()
    if target_block_bytes is None:
        target_block_bytes = default_target

    tiling = _choose_tiling(S, itemsize, target_block_bytes)
    if tiling is None:
        # TODO(synk): slab length not a multiple of 128 — a lane-dense Pallas
        # tiling would need a padding pass (extra HBM read+write); the XLA
        # select below is already a single read + write, so use it instead.
        m = mask.reshape(B, K, 1, 1, 1, 1)
        y = jnp.where(m, x, jnp.zeros_like(x))
        return y.reshape(B, K * C, H, W, Z)

    rows, lane, r_blk, nc = tiling

    x_3d = x.reshape(N, rows, lane)
    mask_flat = mask.reshape(N).astype(jnp.int32)

    # Per-grid-step *source* block indices for the input.  Grid order is
    # (slab, chunk) with chunk fastest; masked steps point at the block that
    # the most recent kept step fetched (block (0,0) if no kept step yet), so
    # consecutive block indices repeat and Pallas skips the input DMA for
    # masked slabs entirely.
    T = N * nc
    t = jnp.arange(T, dtype=jnp.int32)
    slab_t = t // nc
    keep_t = mask_flat[slab_t] != 0
    last_kept = jax.lax.cummax(jnp.where(keep_t, t, -1), axis=0)
    src_t = jnp.where(last_kept >= 0, last_kept, 0)
    src_i = (src_t // nc).astype(jnp.int32)
    src_c = (src_t % nc).astype(jnp.int32)

    def x_index_map(i, c, mask_ref, src_i_ref, src_c_ref):
        step = i * nc + c
        return (src_i_ref[step], src_c_ref[step], 0)

    def o_index_map(i, c, mask_ref, src_i_ref, src_c_ref):
        return (i, c, 0)

    # Advisory cost hint for XLA scheduling around this bandwidth-heavy call
    # (upper bound: read all slabs + write all slabs).
    cost = pl.CostEstimate(
        flops=0, transcendentals=0, bytes_accessed=int(2 * N * S * itemsize)
    )

    out_3d = pl.pallas_call(
        _mask_modal_kernel,
        out_shape=jax.ShapeDtypeStruct((N, rows, lane), x.dtype),
        grid_spec=pltpu.PrefetchScalarGridSpec(
            num_scalar_prefetch=3,
            grid=(N, nc),
            in_specs=[pl.BlockSpec((1, r_blk, lane), x_index_map)],
            out_specs=pl.BlockSpec((1, r_blk, lane), o_index_map),
        ),
        compiler_params=pltpu.CompilerParams(
            dimension_semantics=("parallel", "parallel"),
            vmem_limit_bytes=int(vmem_limit),
        ),
        cost_estimate=cost,
    )(mask_flat, src_i, src_c, x_3d)

    return out_3d.reshape(B, K * C, H, W, Z)


def _reference(x, mask):
    # Pure-JAX reference mirroring the PyTorch module (exact zeros for masked
    # slabs, matching y[mask] = x[mask]).
    B, K, C, H, W, Z = x.shape
    m = mask.reshape(B, K, 1, 1, 1, 1)
    y = jnp.where(m, x, jnp.zeros_like(x))
    return y.reshape(B, K * C, H, W, Z)


def _run_case(key, shape, fix_true, fix_false):
    B, K, C, H, W, Z = shape
    kx, km = jax.random.split(key)
    x = jax.random.normal(kx, shape, dtype=jnp.float32)
    mask = jax.random.bernoulli(km, p=0.5, shape=(B, K))
    # Force at least one kept and one dropped modality so both branches run.
    mask = mask.at[fix_true].set(True).at[fix_false].set(False)

    out = mask_modal(x, mask)
    jax.block_until_ready(out)

    ref = _reference(x, mask)
    assert out.shape == (B, K * C, H, W, Z), f"bad shape for {shape}"
    assert jnp.array_equal(out, ref), f"mismatch vs reference for {shape}"


if __name__ == "__main__":
    key = jax.random.PRNGKey(0)
    k1, k2, k3 = jax.random.split(key, 3)

    # Case 1: lane/sublane-aligned path (spatial 8 vs 80 in the original keeps
    # the example tiny).  Leading slab masked -> exercises the src_t=0
    # fallback (no wasted HBM fetches for leading masked slabs).
    _run_case(k1, (2, 4, 4, 8, 8, 8), fix_true=(0, 1), fix_false=(0, 0))

    # Case 2: slab length divisible by 128 but rows % 8 != 0 -> whole-slab
    # block fallback.
    _run_case(k2, (2, 3, 2, 8, 8, 9), fix_true=(0, 0), fix_false=(1, 2))

    # Case 3: slab length not divisible by 128 -> XLA-select fallback path.
    _run_case(k3, (1, 2, 3, 6, 6, 6), fix_true=(0, 0), fix_false=(0, 1))

    print("KERNEL_OK")
</pallas_src>

<mosaic_0001>
module attributes {stable_mosaic.version = 11 : i64} {
  func.func @_mask_modal_kernel(%arg0: i32, %arg1: i32, %arg2: memref<8xi32, #tpu.memory_space<smem>>, %arg3: memref<8xi32, #tpu.memory_space<smem>>, %arg4: memref<8xi32, #tpu.memory_space<smem>>, %arg5: memref<1x8x256xf32, #tpu.memory_space<vmem>>, %arg6: memref<1x8x256xf32, #tpu.memory_space<vmem>>) attributes {dimension_semantics = [#tpu.dimension_semantics<parallel>, #tpu.dimension_semantics<parallel>], iteration_bounds = array<i64: 8, 1>, scalar_prefetch = 3 : i64, scratch_operands = 0 : i64, tpu.core_type = #tpu.core_type<tc>, window_params = [{transform_indices = @transform_0, window_bounds = array<i64: 1, 8, 256>}, {transform_indices = @transform_1, window_bounds = array<i64: 1, 8, 256>}]} {
    %0 = arith.index_cast %arg0 : i32 to index
    %1 = memref.load %arg2[%0] : memref<8xi32, #tpu.memory_space<smem>>
    %c0_i32 = arith.constant 0 : i32
    %2 = arith.cmpi ne, %1, %c0_i32 : i32
    %3 = arith.extui %2 : i1 to i32
    %c0_i32_0 = arith.constant 0 : i32
    %4 = arith.cmpi ne, %3, %c0_i32_0 : i32
    scf.if %4 {
      %c0 = arith.constant 0 : index
      %c0_2 = arith.constant 0 : index
      %c0_3 = arith.constant 0 : index
      %8 = vector.load %arg5[%c0, %c0_2, %c0_3] : memref<1x8x256xf32, #tpu.memory_space<vmem>>, vector<1x8x256xf32>
      %c0_4 = arith.constant 0 : index
      %c0_5 = arith.constant 0 : index
      %c0_6 = arith.constant 0 : index
      %9 = vector.load %arg6[%c0_4, %c0_5, %c0_6] : memref<1x8x256xf32, #tpu.memory_space<vmem>>, vector<1x8x256xf32>
      tpu.vector_store %arg6[%c0_4, %c0_5, %c0_6], %8 {strides = array<i32>} : memref<1x8x256xf32, #tpu.memory_space<vmem>>, vector<1x8x256xf32>,
    } else {
    }
    %true = arith.constant true
    %5 = arith.xori %2, %true : i1
    %6 = arith.extui %5 : i1 to i32
    %c0_i32_1 = arith.constant 0 : i32
    %7 = arith.cmpi ne, %6, %c0_i32_1 : i32
    scf.if %7 {
      %cst = arith.constant 0.000000e+00 : f32
      %8 = vector.broadcast %cst : f32 to vector<1x8x256xf32>
      %c0 = arith.constant 0 : index
      %c0_2 = arith.constant 0 : index
      %c0_3 = arith.constant 0 : index
      %9 = vector.load %arg6[%c0, %c0_2, %c0_3] : memref<1x8x256xf32, #tpu.memory_space<vmem>>, vector<1x8x256xf32>
      tpu.vector_store %arg6[%c0, %c0_2, %c0_3], %8 {strides = array<i32>} : memref<1x8x256xf32, #tpu.memory_space<vmem>>, vector<1x8x256xf32>,
    } else {
    }
    return
  }
  func.func @transform_0(%arg0: i32, %arg1: i32, %arg2: memref<8xi32, #tpu.memory_space<smem>>, %arg3: memref<8xi32, #tpu.memory_space<smem>>, %arg4: memref<8xi32, #tpu.memory_space<smem>>) -> (i32, i32, i32) {
    %c1_i32 = arith.constant 1 : i32
    %0 = arith.muli %arg0, %c1_i32 : i32
    %1 = arith.addi %0, %arg1 : i32
    %2 = arith.index_cast %1 : i32 to index
    %3 = memref.load %arg3[%2] : memref<8xi32, #tpu.memory_space<smem>>
    %4 = arith.index_cast %1 : i32 to index
    %5 = memref.load %arg4[%4] : memref<8xi32, #tpu.memory_space<smem>>
    %c0_i32 = arith.constant 0 : i32
    %c0_i32_0 = arith.constant 0 : i32
    return %3, %5, %c0_i32 : i32, i32, i32
  }
  func.func @transform_1(%arg0: i32, %arg1: i32, %arg2: memref<8xi32, #tpu.memory_space<smem>>, %arg3: memref<8xi32, #tpu.memory_space<smem>>, %arg4: memref<8xi32, #tpu.memory_space<smem>>) -> (i32, i32, i32) {
    %c0_i32 = arith.constant 0 : i32
    %c0_i32_0 = arith.constant 0 : i32
    return %arg0, %arg1, %c0_i32 : i32, i32, i32
  }
}

</mosaic_0001>

<llo_original>
// kernel: tpu_custom_call.1
$region0: #{tpu_custom_call.1}
  #allocation0 [shape = 'u32[]', space=smem, size = 0x4, offset = 0x4, fixed_abs, tag = 'smem constant byte address 0x4 - core index']
  #allocation1 [shape = 'u32[144,128]{1,0:T(1,128)}', space=vmem, size = 0x12000, scoped, tag = 'internal scratch']
  #allocation2 [shape = 's32[1]{0}', space=sflag, size = 0x4, scoped, tag = 'scoped memory for tpu_custom_call.1']
  #allocation3 [shape = 'u8[512]{0}', space=smem, size = 0x200, scoped, tag = 'prefetched SMEM operand 0']
  #allocation4 [shape = 'u8[512]{0}', space=smem, size = 0x200, scoped, tag = 'prefetched SMEM operand 1']
  #allocation5 [shape = 'u8[512]{0}', space=smem, size = 0x200, scoped, tag = 'prefetched SMEM operand 2']
  %s0 = inlined_call_operand.hbm [shape: s32[8], index: 0, kind: input, shape index: {}]
  %s1 = inlined_call_operand.vmem [shape: s32[8], index: 1, kind: input, shape index: {}]
  %s2 = inlined_call_operand.vmem [shape: s32[8], index: 2, kind: input, shape index: {}]
  %s3 = inlined_call_operand.hbm [shape: f32[8,8,256], index: 3, kind: input, shape index: {}]
  %s4 = inlined_call_operand.hbm [shape: f32[8,8,256], index: 4, kind: output, shape index: {}]
  %s5 = sld [smem:[#allocation0]]
  $region49: #{tpu_custom_call.1} parent=0
    _
  %s7 = ssub.s32 1, %s5
  %s8 = scalar_select 0, %s7, %s5
  %10 = dma.hbm_to_smem %s0, 16, [#allocation3], [#allocation2]
  %s11 = sshll.u32 %s1, 4
  %s12 = int_to_ptr.vmem [resolvable:$true] %s11
  %14 = dma.vmem_to_smem %s12, 16, [#allocation4], [#allocation2]
  %s15 = sshll.u32 %s2, 4
  %s16 = int_to_ptr.vmem [resolvable:$true] %s15
  %18 = dma.vmem_to_smem %s16, 16, [#allocation5], [#allocation2]
  %19 = dma.done [#allocation2], 48
  %20 = sfence
  $region1: #{tpu_custom_call.1} parent=0
    #allocation6 [shape = 'u8[16384]{0}', space=vmem, size = 0x4000, scoped, tag = 'input window, operand 3']
    #allocation7 [shape = 's32[2]{0}', space=sflag, size = 0x8, scoped, tag = 'scoped memory for tpu_custom_call.1']
    #allocation8 [shape = 's32[2]{0}', space=sflag, size = 0x8, scoped, tag = 'scoped memory for tpu_custom_call.1']
    #allocation9 [shape = 'u8[16384]{0}', space=vmem, size = 0x4000, scoped, tag = 'output window, operand 0']
    %21 = vsyncpa [#allocation7], 0
    %s22 = scalar_lea.sflag [#allocation7], 1
    %23 = vsyncpa %s22, 0
    %24 = vsyncpa [#allocation8], 0
    %s25 = scalar_lea.sflag [#allocation8], 1
    %26 = vsyncpa %s25, 0
    loop: start=0, step=1, limit=10
    $region2: #{tpu_custom_call.1} parent=1 // loop_pre_header
      _
    $region3: #{tpu_custom_call.1} parent=1 // loop_header
      %s28 = sphi 0, %s32
      %p29 = scmp.ge.s32.totalorder %s28, 10
      %s35 = sphi 0, %s47
      %s36 = sphi 0, %s43
      %s37 = sphi 0, %s35
      %s38 = sphi 0, %s36
      %s39 = sphi 0, %s37
      %s40 = sphi 0, %s38
      %s58 = sphi 0, %s60
      %s61 = sphi 0, %s58
      %s62 = sphi 0, %s61
      %s78 = sphi 0, %s62
      %s86 = sphi 0, %s88
      %s89 = sphi 0, %s86
      %s90 = sphi 0, %s89
      %s106 = sphi 0, %s90
    $region4: #{tpu_custom_call.1} parent=1 // loop_header_branch
      %31 = sbr.rel (%p29) target = $region8
    $region5: #{tpu_custom_call.1} parent=1 // loop_body
      %s33 = ssub.s32 %s28, 1
      %s34 = ssub.s32 %s28, 2
      %s41 = sadd.s32 1, %s36
      %p42 = scmp.ge.s32.totalorder %s41, 1
      %s43 = scalar_select %p42, 0, %s41
      %s44 = sadd.s32 1, %s35
      %s45 = scalar_select %p42, %s44, %s35
      %p46 = scmp.ge.s32.totalorder %s45, 8
      %s47 = scalar_select %p46, 0, %s45
      %s48 = sadd.s32 %s35, %s36
      %s49 = sld [smem:[#allocation4 + %s48]]
      %s50 = sld [smem:[#allocation5 + %s48]]
      %s51 = sadd.s32 %s47, %s43
      %s52 = sld [smem:[#allocation4 + %s51]]
      %s53 = sld [smem:[#allocation5 + %s51]]
      %s54 = ssub.s32 %s49, %s52
      %s55 = ssub.s32 %s50, %s53
      %s56 = sor.u32 %s54, %s55
      %p57 = scmp.eq.s32.totalorder %s56, 0
      %s59 = sadd.s32 %s58, 1
      %s60 = scalar_select %p57, %s58, %s59
      %p63 = pneg %p57
      %p64 = scmp.eq.s32.totalorder %s28, 7
      %p65 = por %p63, %p64
      %p66 = scmp.ne.s32.totalorder %s58, %s61
      %p67 = scmp.eq.s32.totalorder %s28, 0
      %p68 = por %p66, %p67
      %p69 = scmp.ne.s32.totalorder %s58, %s61
      %p70 = scmp.eq.s32.totalorder %s33, 7
      %p71 = por %p69, %p70
      %p72 = scmp.ne.s32.totalorder %s61, %s62
      %p73 = scmp.eq.s32.totalorder %s33, 0
      %p74 = por %p72, %p73
      %p75 = scmp.ne.s32.totalorder %s61, %s62
      %p76 = scmp.eq.s32.totalorder %s34, 7
      %p77 = por %p75, %p76
      %p79 = scmp.ne.s32.totalorder %s62, %s78
      %p80 = scmp.eq.s32.totalorder %s34, 0
      %p81 = por %p79, %p80
      %s82 = ssub.s32 %s35, %s47
      %s83 = ssub.s32 %s36, %s43
      %s84 = sor.u32 %s82, %s83
      %p85 = scmp.eq.s32.totalorder %s84, 0
      %s87 = sadd.s32 %s86, 1
      %s88 = scalar_select %p85, %s86, %s87
      %p91 = pneg %p85
      %p92 = scmp.eq.s32.totalorder %s28, 7
      %p93 = por %p91, %p92
      %p94 = scmp.ne.s32.totalorder %s86, %s89
      %p95 = scmp.eq.s32.totalorder %s28, 0
      %p96 = por %p94, %p95
      %p97 = scmp.ne.s32.totalorder %s86, %s89
      %p98 = scmp.eq.s32.totalorder %s33, 7
      %p99 = por %p97, %p98
      %p100 = scmp.ne.s32.totalorder %s89, %s90
      %p101 = scmp.eq.s32.totalorder %s33, 0
      %p102 = por %p100, %p101
      %p103 = scmp.ne.s32.totalorder %s89, %s90
      %p104 = scmp.eq.s32.totalorder %s34, 7
      %p105 = por %p103, %p104
      %p107 = scmp.ne.s32.totalorder %s90, %s106
      %p108 = scmp.eq.s32.totalorder %s34, 0
      %p109 = por %p107, %p108
      %p110 = scmp.le.s32.totalorder 1, %s28
      %p111 = scmp.lt.s32.totalorder %s28, 9
      %p112 = pnand %p110, %p111
      %p113 = pneg %p112
      // Predicated region
      $region9: #{tpu_custom_call.1} parent=5 // pred_check
        _
      $region10: #{tpu_custom_call.1} parent=5 // pred_check_branch
        %115 = sbr.rel (%p112) target = $region12
      $region11: #{tpu_custom_call.1} parent=5 // pred_region
        %s116 = ssub.s32 %s28, 1
      $region12: #{tpu_custom_call.1} parent=5 // pred_fallthru
        _
      %p117 = scmp.lt.s32.totalorder %s28, 8
      // Predicated region
      $region13: #{tpu_custom_call.1} parent=5 // pred_check
        %p118 = pneg %p117
      $region14: #{tpu_custom_call.1} parent=5 // pred_check_branch
        %120 = sbr.rel (%p118) target = $region16
      $region15: #{tpu_custom_call.1} parent=5 // pred_region
        // Predicated region
        $region17: #{tpu_custom_call.1} parent=15 // pred_check
          %p121 = pneg %p68
        $region18: #{tpu_custom_call.1} parent=15 // pred_check_branch
          %123 = sbr.rel (%p121) target = $region20
        $region19: #{tpu_custom_call.1} parent=15 // pred_region
          %s124 = sand.u32 %s58, 1
          %s125 = scalar_lea.sflag [#allocation7], %s124
          %s126 = sand.u32 %s58, 1
          %s127 = smul.addr %s126, 16
          %s128 = scalar_lea.vmem [#allocation6], %s127
          %s129 = sadd.s32 %s35, %s36
          %s130 = sld [smem:[#allocation4 + %s129]]
          %s131 = sld [smem:[#allocation5 + %s129]]
          %s133 = ssub.s32 256, 256
          %134 = vsyncadd %s125, %s133
          %s135 = smul.addr %s131, 2
          %s136 = smul.addr %s130, 2
          %s137 = sadd.s32 %s135, %s136
          %s138 = smul.addr %s137, 128
          %s139 = scalar_lea.hbm %s3, %s138
          %s141 = sshll.u32 %s128, 4
          %s142 = int_to_ptr.vmem [resolvable:$true] %s141
          %144 = dma.hbm_to_vmem [thread:$0]  %s139, 256, %s142, %s125
        $region20: #{tpu_custom_call.1} parent=15 // pred_fallthru
          _
      $region16: #{tpu_custom_call.1} parent=5 // pred_fallthru
        _
      %p145 = scmp.le.s32.totalorder 1, %s28
      %p146 = scmp.lt.s32.totalorder %s28, 9
      %p147 = pnand %p145, %p146
      %p148 = pneg %p147
      // Predicated region
      $region21: #{tpu_custom_call.1} parent=5 // pred_check
        _
      $region22: #{tpu_custom_call.1} parent=5 // pred_check_branch
        %150 = sbr.rel (%p147) target = $region24
      $region23: #{tpu_custom_call.1} parent=5 // pred_region
        %s151 = ssub.s32 %s28, 1
        %s152 = sand.u32 %s61, 1
        %s153 = scalar_lea.sflag [#allocation7], %s152
        %s154 = sand.u32 %s61, 1
        %s155 = smul.addr %s154, 16
        %s156 = scalar_lea.vmem [#allocation6], %s155
        // Predicated region
        $region25: #{tpu_custom_call.1} parent=23 // pred_check
          %p157 = pneg %p74
        $region26: #{tpu_custom_call.1} parent=23 // pred_check_branch
          %159 = sbr.rel (%p157) target = $region28
        $region27: #{tpu_custom_call.1} parent=23 // pred_region
          %160 = dma.done %s153, 256
        $region28: #{tpu_custom_call.1} parent=23 // pred_fallthru
          _
        %s161 = sand.u32 %s61, 1
        %s162 = scalar_lea.sflag [#allocation7], %s161
        %s163 = sand.u32 %s61, 1
        %s164 = smul.addr %s163, 16
        %s165 = scalar_lea.vmem [#allocation6], %s164
        %p166 = pneg %p74
        %p167 = pneg %p71
        %p168 = pneg %p102
        %p169 = pneg %p99
        %s170 = sand.u32 %s89, 1
        %s171 = scalar_lea.sflag [#allocation8], %s170
        %s172 = sand.u32 %s89, 1
        %s173 = smul.addr %s172, 16
        %s174 = scalar_lea.vmem [#allocation9], %s173
        %s175 = sadd.s32 %s37, %s38
        %s176 = sld [smem:[#allocation4 + %s175]]
        %s177 = sld [smem:[#allocation5 + %s175]]
        %s178 = sld [smem:[#allocation3 + %s37]]
        %p179 = scmp.ne.s32.totalorder %s178, 0
        // Predicated region
        $region29: #{tpu_custom_call.1} parent=23 // pred_check
          %p180 = pneg %p179
        $region30: #{tpu_custom_call.1} parent=23 // pred_check_branch
          %182 = sbr.rel (%p180) target = $region32
        $region31: #{tpu_custom_call.1} parent=23 // pred_region
          %v183 = vld [vmem:[%s156] sm:$0xff]
          %v184 = vld [vmem:[%s156 + $0x8] sm:$0xff]
          %185 = vst [vmem:[%s174] sm:$0xff] %v183
          %186 = vst [vmem:[%s174 + $0x8] sm:$0xff] %v184
        $region32: #{tpu_custom_call.1} parent=23 // pred_fallthru
          _
        %p187 = scmp.eq.s32.totalorder %s178, 0
        // Predicated region
        $region33: #{tpu_custom_call.1} parent=23 // pred_check
          %p188 = pneg %p187
        $region34: #{tpu_custom_call.1} parent=23 // pred_check_branch
          %190 = sbr.rel (%p188) target = $region36
        $region35: #{tpu_custom_call.1} parent=23 // pred_region
          %191 = vst [vmem:[%s174] sm:$0xff] 0.0
          %192 = vst [vmem:[%s174 + $0x8] sm:$0xff] 0.0
        $region36: #{tpu_custom_call.1} parent=23 // pred_fallthru
          _
        %s193 = sand.u32 %s89, 1
        %s194 = scalar_lea.sflag [#allocation8], %s193
        %s195 = sand.u32 %s89, 1
        %s196 = smul.addr %s195, 16
        %s197 = scalar_lea.vmem [#allocation9], %s196
        // Predicated region
        $region37: #{tpu_custom_call.1} parent=23 // pred_check
          %p198 = pneg %p99
        $region38: #{tpu_custom_call.1} parent=23 // pred_check_branch
          %200 = sbr.rel (%p198) target = $region40
        $region39: #{tpu_custom_call.1} parent=23 // pred_region
          %s202 = ssub.s32 256, 256
          %203 = vsyncadd %s194, %s202
          %s204 = smul.addr %s38, 2
          %s205 = smul.addr %s37, 2
          %s206 = sadd.s32 %s204, %s205
          %s207 = smul.addr %s206, 128
          %s208 = scalar_lea.hbm %s4, %s207
          %s210 = sshll.u32 %s197, 4
          %s211 = int_to_ptr.vmem [resolvable:$true] %s210
          %213 = dma.vmem_to_hbm [thread:$0]  %s211, 256, %s208, %s194
        $region40: #{tpu_custom_call.1} parent=23 // pred_fallthru
          _
      $region24: #{tpu_custom_call.1} parent=5 // pred_fallthru
        _
      %p214 = scmp.le.s32.totalorder 2, %s28
      // Predicated region
      $region41: #{tpu_custom_call.1} parent=5 // pred_check
        %p215 = pneg %p214
      $region42: #{tpu_custom_call.1} parent=5 // pred_check_branch
        %217 = sbr.rel (%p215) target = $region44
      $region43: #{tpu_custom_call.1} parent=5 // pred_region
        %s218 = ssub.s32 %s28, 2
        // Predicated region
        $region45: #{tpu_custom_call.1} parent=43 // pred_check
          %p219 = pneg %p105
        $region46: #{tpu_custom_call.1} parent=43 // pred_check_branch
          %221 = sbr.rel (%p219) target = $region48
        $region47: #{tpu_custom_call.1} parent=43 // pred_region
          %s222 = sand.u32 %s90, 1
          %s223 = scalar_lea.sflag [#allocation8], %s222
          %s224 = sand.u32 %s90, 1
          %s225 = smul.addr %s224, 16
          %s226 = scalar_lea.vmem [#allocation9], %s225
          %227 = dma.done %s223, 256
        $region48: #{tpu_custom_call.1} parent=43 // pred_fallthru
          _
      $region44: #{tpu_custom_call.1} parent=5 // pred_fallthru
        _
    $region6: #{tpu_custom_call.1} parent=1 // loop_footer
      %s32 = sadd.s32 1, %s28
    $region7: #{tpu_custom_call.1} parent=1 // loop_footer_branch
      %27 = sbr.rel target = $region3
    $region8: #{tpu_custom_call.1} parent=1 // loop_exit
      _
    %228 = vsyncpa [#allocation7], 1
    %s229 = scalar_lea.sflag [#allocation7], 1
    %230 = vsyncpa %s229, 1
    %231 = vsyncpa [#allocation8], 1
    %s232 = scalar_lea.sflag [#allocation8], 1
    %233 = vsyncpa %s232, 1

</llo_original>
